<compile_context>
chip_gen: v7x
topology: tpu7x:2x2x1
jax: 0.10.0
libtpu: 0.0.40
codegen_flags: <defaults>
</compile_context>

<pallas_src>
import functools

import jax
import jax.numpy as jnp
from jax.experimental import pallas as pl
from jax.experimental.pallas import tpu as pltpu

# ----------------------------- "config" ------------------------------------
FEAT_DIM = 32                      # config.feat_dim
ROUTE_DEPTH = 4                    # config.route_depth
ROUTE_CNT = 2 ** ROUTE_DEPTH - 1   # number of internal tree nodes = 15
ROUTE_COUNT = 4                    # routes per POI (from id2route's shape)
POI_CNT = 50
CONTEXT_SIZE = 8
BATCH = 2


# ------------------------------ Pallas kernel -------------------------------
def _poi2vec_kernel(ctx_idx_ref, route_idx_ref,     # SMEM int32 indices
                    poi_w_ref, route_w_ref,         # VMEM embedding tables
                    lr_ref, prob_ref,               # VMEM (RD-1, M) / (1, M)
                    loss_ref,                       # VMEM (1, 1) output
                    *, B, C, RC, RD, F):
    M = B * RC

    # ---- fused context gather + sum:  phi[b] = sum_c poi_weight[context[b, c]]
    phi_rows = []
    for b in range(B):
        acc = poi_w_ref[pl.ds(ctx_idx_ref[b, 0], 1), :]          # (1, F)
        for c in range(1, C):
            acc = acc + poi_w_ref[pl.ds(ctx_idx_ref[b, c], 1), :]
        phi_rows.append(acc)

    # Broadcast phi per route:  phi_m[b*RC + r] = phi[b]   -> (M, F)
    phi_m = jnp.concatenate(
        [phi_rows[b] for b in range(B) for _ in range(RC)], axis=0)

    # ---- fused route-embedding gather, depth-major so depth is the sublane
    # axis and B*RC is the lane axis of everything downstream.
    rte_rows = []
    for d in range(RD):
        for b in range(B):
            for r in range(RC):
                idx = route_idx_ref[b, r * RD + d]
                rte_rows.append(route_w_ref[pl.ds(idx, 1), :])   # (1, F)
    rte = jnp.concatenate(rte_rows, axis=0).reshape(RD, M, F)

    # psi[d, m] = <route_emb[d, m, :], phi_m[m, :]>  — single flattened VPU
    # contraction (multiply + one lane reduce over feat_dim).
    psi = jnp.sum(rte * phi_m[None, :, :], axis=-1)              # (RD, M)
    psi = jax.nn.sigmoid(psi)

    # pow(2*psi, lr) - psi with binary left/right lr.  Depths 0..RD-2 use the
    # stored lr; the last depth corresponds to the zero-pad in the reference,
    # i.e. trans_last = 1 - psi_last (handled directly, no zero-row concat).
    psi_head = psi[0:RD - 1, :]                                  # (RD-1, M)
    psi_last = psi[RD - 1:RD, :]                                 # (1, M)
    trans_head = jnp.where(lr_ref[...] != 0.0, 2.0 * psi_head, 1.0) - psi_head
    trans_last = 1.0 - psi_last

    # Product over route depth: static sublane-row slices, lanes stay M-dense.
    pr = trans_last
    for d in range(RD - 1):
        pr = pr * trans_head[d:d + 1, :]                         # (1, M)

    # loss = -(1/B) * sum_{b, r} pr * prob
    loss_ref[...] = -jnp.sum(pr * prob_ref[...], keepdims=True) / B


# ------------------------------ wrapper -------------------------------------
@jax.jit
def poi2vec_loss(poi_weight, route_weight, id2route, id2lr, id2prob,
                 context, target):
    B = target.shape[0]
    C = context.shape[1]
    _, RC, RD = id2route.shape
    F = poi_weight.shape[1]
    M = B * RC

    # Trivial per-target index/param prep (tiny rows); the big embedding
    # gathers happen inside the kernel.
    route_idx = id2route[target].reshape(B, RC * RD).astype(jnp.int32)   # (B, RC*RD)
    lr_t = jnp.transpose(id2lr[target].astype(jnp.float32),
                         (2, 0, 1)).reshape(RD - 1, M)                   # (RD-1, M)
    prob = id2prob[target].astype(jnp.float32).reshape(1, M)             # (1, M)
    ctx_idx = context.astype(jnp.int32)                                  # (B, C)

    kernel = functools.partial(_poi2vec_kernel, B=B, C=C, RC=RC, RD=RD, F=F)
    loss = pl.pallas_call(
        kernel,
        out_shape=jax.ShapeDtypeStruct((1, 1), jnp.float32),
        in_specs=[
            pl.BlockSpec(memory_space=pltpu.MemorySpace.SMEM),   # ctx_idx
            pl.BlockSpec(memory_space=pltpu.MemorySpace.SMEM),   # route_idx
            pl.BlockSpec(memory_space=pltpu.MemorySpace.VMEM),   # poi_weight
            pl.BlockSpec(memory_space=pltpu.MemorySpace.VMEM),   # route_weight
            pl.BlockSpec(memory_space=pltpu.MemorySpace.VMEM),   # lr
            pl.BlockSpec(memory_space=pltpu.MemorySpace.VMEM),   # prob
        ],
        out_specs=pl.BlockSpec(memory_space=pltpu.MemorySpace.VMEM),
    )(ctx_idx, route_idx,
      poi_weight.astype(jnp.float32), route_weight.astype(jnp.float32),
      lr_t, prob)
    return loss[0, 0]


# --------------------------- plain-JAX reference -----------------------------
def reference_loss(poi_weight, route_weight, id2route, id2lr, id2prob,
                   context, target):
    route = id2route[target]
    B, RC, RD = route.shape
    lr = jnp.concatenate(
        [id2lr[target], jnp.zeros((B, RC, 1), jnp.float32)], axis=2
    ).reshape(B, RC * RD)
    prob = id2prob[target].astype(jnp.float32)
    ctx = poi_weight[context]                                  # (B, C, F)
    rte = route_weight[route.reshape(B, RC * RD)]              # (B, RC*RD, F)
    phi = jnp.sum(ctx, axis=1, keepdims=True).transpose(0, 2, 1)   # (B, F, 1)
    psi = jnp.matmul(rte, phi)[:, :, 0]                        # (B, RC*RD)
    psi = jax.nn.sigmoid(psi)
    psi = jnp.power(2.0 * psi, lr) - psi
    psi = psi.reshape(B, RC, RD)
    pr = jnp.ones((B, RC), jnp.float32)
    for i in range(RD):
        pr = pr * psi[:, :, i]
    pr = jnp.sum(pr * prob, axis=1)
    return -jnp.mean(pr)


# --------------------------------- main --------------------------------------
if __name__ == "__main__":
    key = jax.random.PRNGKey(0)
    k = jax.random.split(key, 7)

    # Embedding weights (nn.Embedding, padding_idx=0 -> row 0 zeroed).
    poi_weight = 0.1 * jax.random.normal(k[0], (POI_CNT, FEAT_DIM), jnp.float32)
    poi_weight = poi_weight.at[0].set(0.0)
    route_weight = 0.1 * jax.random.normal(k[1], (ROUTE_CNT, FEAT_DIM), jnp.float32)
    route_weight = route_weight.at[0].set(0.0)

    # Registered buffers.
    id2route = jax.random.randint(
        k[2], (POI_CNT, ROUTE_COUNT, ROUTE_DEPTH), 0, ROUTE_CNT, jnp.int32)
    id2lr = jax.random.bernoulli(
        k[3], 0.5, (POI_CNT, ROUTE_COUNT, ROUTE_DEPTH - 1)).astype(jnp.float32)
    id2prob = jax.random.uniform(k[4], (POI_CNT, ROUTE_COUNT), jnp.float32)

    # Forward inputs.
    context = jax.random.randint(k[5], (BATCH, CONTEXT_SIZE), 0, POI_CNT, jnp.int32)
    target = jax.random.randint(k[6], (BATCH,), 0, POI_CNT, jnp.int32)

    loss = poi2vec_loss(poi_weight, route_weight, id2route, id2lr, id2prob,
                        context, target)
    jax.block_until_ready(loss)

    ref = reference_loss(poi_weight, route_weight, id2route, id2lr, id2prob,
                         context, target)
    assert abs(float(loss) - float(ref)) < 1e-4, (float(loss), float(ref))

    print("KERNEL_OK")
</pallas_src>

<mosaic_0001>
module attributes {stable_mosaic.version = 11 : i64} {
  func.func @_poi2vec_kernel(%arg0: memref<2x8xi32, #tpu.memory_space<smem>>, %arg1: memref<2x16xi32, #tpu.memory_space<smem>>, %arg2: memref<50x32xf32, #tpu.memory_space<vmem>>, %arg3: memref<15x32xf32, #tpu.memory_space<vmem>>, %arg4: memref<3x8xf32, #tpu.memory_space<vmem>>, %arg5: memref<1x8xf32, #tpu.memory_space<vmem>>, %arg6: memref<1x1xf32, #tpu.memory_space<vmem>>) attributes {dimension_semantics = [], scalar_prefetch = 0 : i64, scratch_operands = 0 : i64, tpu.core_type = #tpu.core_type<tc>} {
    %c0 = arith.constant 0 : index
    %c0_0 = arith.constant 0 : index
    %0 = memref.load %arg0[%c0, %c0_0] : memref<2x8xi32, #tpu.memory_space<smem>>
    %1 = arith.index_cast %0 : i32 to index
    %c0_1 = arith.constant 0 : index
    %2 = vector.load %arg2[%1, %c0_1] : memref<50x32xf32, #tpu.memory_space<vmem>>, vector<1x32xf32>
    %c0_2 = arith.constant 0 : index
    %c1 = arith.constant 1 : index
    %3 = memref.load %arg0[%c0_2, %c1] : memref<2x8xi32, #tpu.memory_space<smem>>
    %4 = arith.index_cast %3 : i32 to index
    %c0_3 = arith.constant 0 : index
    %5 = vector.load %arg2[%4, %c0_3] : memref<50x32xf32, #tpu.memory_space<vmem>>, vector<1x32xf32>
    %6 = arith.addf %2, %5 : vector<1x32xf32>
    %c0_4 = arith.constant 0 : index
    %c2 = arith.constant 2 : index
    %7 = memref.load %arg0[%c0_4, %c2] : memref<2x8xi32, #tpu.memory_space<smem>>
    %8 = arith.index_cast %7 : i32 to index
    %c0_5 = arith.constant 0 : index
    %9 = vector.load %arg2[%8, %c0_5] : memref<50x32xf32, #tpu.memory_space<vmem>>, vector<1x32xf32>
    %10 = arith.addf %6, %9 : vector<1x32xf32>
    %c0_6 = arith.constant 0 : index
    %c3 = arith.constant 3 : index
    %11 = memref.load %arg0[%c0_6, %c3] : memref<2x8xi32, #tpu.memory_space<smem>>
    %12 = arith.index_cast %11 : i32 to index
    %c0_7 = arith.constant 0 : index
    %13 = vector.load %arg2[%12, %c0_7] : memref<50x32xf32, #tpu.memory_space<vmem>>, vector<1x32xf32>
    %14 = arith.addf %10, %13 : vector<1x32xf32>
    %c0_8 = arith.constant 0 : index
    %c4 = arith.constant 4 : index
    %15 = memref.load %arg0[%c0_8, %c4] : memref<2x8xi32, #tpu.memory_space<smem>>
    %16 = arith.index_cast %15 : i32 to index
    %c0_9 = arith.constant 0 : index
    %17 = vector.load %arg2[%16, %c0_9] : memref<50x32xf32, #tpu.memory_space<vmem>>, vector<1x32xf32>
    %18 = arith.addf %14, %17 : vector<1x32xf32>
    %c0_10 = arith.constant 0 : index
    %c5 = arith.constant 5 : index
    %19 = memref.load %arg0[%c0_10, %c5] : memref<2x8xi32, #tpu.memory_space<smem>>
    %20 = arith.index_cast %19 : i32 to index
    %c0_11 = arith.constant 0 : index
    %21 = vector.load %arg2[%20, %c0_11] : memref<50x32xf32, #tpu.memory_space<vmem>>, vector<1x32xf32>
    %22 = arith.addf %18, %21 : vector<1x32xf32>
    %c0_12 = arith.constant 0 : index
    %c6 = arith.constant 6 : index
    %23 = memref.load %arg0[%c0_12, %c6] : memref<2x8xi32, #tpu.memory_space<smem>>
    %24 = arith.index_cast %23 : i32 to index
    %c0_13 = arith.constant 0 : index
    %25 = vector.load %arg2[%24, %c0_13] : memref<50x32xf32, #tpu.memory_space<vmem>>, vector<1x32xf32>
    %26 = arith.addf %22, %25 : vector<1x32xf32>
    %c0_14 = arith.constant 0 : index
    %c7 = arith.constant 7 : index
    %27 = memref.load %arg0[%c0_14, %c7] : memref<2x8xi32, #tpu.memory_space<smem>>
    %28 = arith.index_cast %27 : i32 to index
    %c0_15 = arith.constant 0 : index
    %29 = vector.load %arg2[%28, %c0_15] : memref<50x32xf32, #tpu.memory_space<vmem>>, vector<1x32xf32>
    %30 = arith.addf %26, %29 : vector<1x32xf32>
    %c1_16 = arith.constant 1 : index
    %c0_17 = arith.constant 0 : index
    %31 = memref.load %arg0[%c1_16, %c0_17] : memref<2x8xi32, #tpu.memory_space<smem>>
    %32 = arith.index_cast %31 : i32 to index
    %c0_18 = arith.constant 0 : index
    %33 = vector.load %arg2[%32, %c0_18] : memref<50x32xf32, #tpu.memory_space<vmem>>, vector<1x32xf32>
    %c1_19 = arith.constant 1 : index
    %c1_20 = arith.constant 1 : index
    %34 = memref.load %arg0[%c1_19, %c1_20] : memref<2x8xi32, #tpu.memory_space<smem>>
    %35 = arith.index_cast %34 : i32 to index
    %c0_21 = arith.constant 0 : index
    %36 = vector.load %arg2[%35, %c0_21] : memref<50x32xf32, #tpu.memory_space<vmem>>, vector<1x32xf32>
    %37 = arith.addf %33, %36 : vector<1x32xf32>
    %c1_22 = arith.constant 1 : index
    %c2_23 = arith.constant 2 : index
    %38 = memref.load %arg0[%c1_22, %c2_23] : memref<2x8xi32, #tpu.memory_space<smem>>
    %39 = arith.index_cast %38 : i32 to index
    %c0_24 = arith.constant 0 : index
    %40 = vector.load %arg2[%39, %c0_24] : memref<50x32xf32, #tpu.memory_space<vmem>>, vector<1x32xf32>
    %41 = arith.addf %37, %40 : vector<1x32xf32>
    %c1_25 = arith.constant 1 : index
    %c3_26 = arith.constant 3 : index
    %42 = memref.load %arg0[%c1_25, %c3_26] : memref<2x8xi32, #tpu.memory_space<smem>>
    %43 = arith.index_cast %42 : i32 to index
    %c0_27 = arith.constant 0 : index
    %44 = vector.load %arg2[%43, %c0_27] : memref<50x32xf32, #tpu.memory_space<vmem>>, vector<1x32xf32>
    %45 = arith.addf %41, %44 : vector<1x32xf32>
    %c1_28 = arith.constant 1 : index
    %c4_29 = arith.constant 4 : index
    %46 = memref.load %arg0[%c1_28, %c4_29] : memref<2x8xi32, #tpu.memory_space<smem>>
    %47 = arith.index_cast %46 : i32 to index
    %c0_30 = arith.constant 0 : index
    %48 = vector.load %arg2[%47, %c0_30] : memref<50x32xf32, #tpu.memory_space<vmem>>, vector<1x32xf32>
    %49 = arith.addf %45, %48 : vector<1x32xf32>
    %c1_31 = arith.constant 1 : index
    %c5_32 = arith.constant 5 : index
    %50 = memref.load %arg0[%c1_31, %c5_32] : memref<2x8xi32, #tpu.memory_space<smem>>
    %51 = arith.index_cast %50 : i32 to index
    %c0_33 = arith.constant 0 : index
    %52 = vector.load %arg2[%51, %c0_33] : memref<50x32xf32, #tpu.memory_space<vmem>>, vector<1x32xf32>
    %53 = arith.addf %49, %52 : vector<1x32xf32>
    %c1_34 = arith.constant 1 : index
    %c6_35 = arith.constant 6 : index
    %54 = memref.load %arg0[%c1_34, %c6_35] : memref<2x8xi32, #tpu.memory_space<smem>>
    %55 = arith.index_cast %54 : i32 to index
    %c0_36 = arith.constant 0 : index
    %56 = vector.load %arg2[%55, %c0_36] : memref<50x32xf32, #tpu.memory_space<vmem>>, vector<1x32xf32>
    %57 = arith.addf %53, %56 : vector<1x32xf32>
    %c1_37 = arith.constant 1 : index
    %c7_38 = arith.constant 7 : index
    %58 = memref.load %arg0[%c1_37, %c7_38] : memref<2x8xi32, #tpu.memory_space<smem>>
    %59 = arith.index_cast %58 : i32 to index
    %c0_39 = arith.constant 0 : index
    %60 = vector.load %arg2[%59, %c0_39] : memref<50x32xf32, #tpu.memory_space<vmem>>, vector<1x32xf32>
    %61 = arith.addf %57, %60 : vector<1x32xf32>
    %62 = tpu.concatenate %30, %30, %30, %30, %61, %61, %61, %61 in 0 : vector<1x32xf32>, vector<1x32xf32>, vector<1x32xf32>, vector<1x32xf32>, vector<1x32xf32>, vector<1x32xf32>, vector<1x32xf32>, vector<1x32xf32> -> vector<8x32xf32>
    %c0_40 = arith.constant 0 : index
    %c0_41 = arith.constant 0 : index
    %63 = memref.load %arg1[%c0_40, %c0_41] : memref<2x16xi32, #tpu.memory_space<smem>>
    %64 = arith.index_cast %63 : i32 to index
    %c0_42 = arith.constant 0 : index
    %65 = vector.load %arg3[%64, %c0_42] : memref<15x32xf32, #tpu.memory_space<vmem>>, vector<1x32xf32>
    %c0_43 = arith.constant 0 : index
    %c4_44 = arith.constant 4 : index
    %66 = memref.load %arg1[%c0_43, %c4_44] : memref<2x16xi32, #tpu.memory_space<smem>>
    %67 = arith.index_cast %66 : i32 to index
    %c0_45 = arith.constant 0 : index
    %68 = vector.load %arg3[%67, %c0_45] : memref<15x32xf32, #tpu.memory_space<vmem>>, vector<1x32xf32>
    %c0_46 = arith.constant 0 : index
    %c8 = arith.constant 8 : index
    %69 = memref.load %arg1[%c0_46, %c8] : memref<2x16xi32, #tpu.memory_space<smem>>
    %70 = arith.index_cast %69 : i32 to index
    %c0_47 = arith.constant 0 : index
    %71 = vector.load %arg3[%70, %c0_47] : memref<15x32xf32, #tpu.memory_space<vmem>>, vector<1x32xf32>
    %c0_48 = arith.constant 0 : index
    %c12 = arith.constant 12 : index
    %72 = memref.load %arg1[%c0_48, %c12] : memref<2x16xi32, #tpu.memory_space<smem>>
    %73 = arith.index_cast %72 : i32 to index
    %c0_49 = arith.constant 0 : index
    %74 = vector.load %arg3[%73, %c0_49] : memref<15x32xf32, #tpu.memory_space<vmem>>, vector<1x32xf32>
    %c1_50 = arith.constant 1 : index
    %c0_51 = arith.constant 0 : index
    %75 = memref.load %arg1[%c1_50, %c0_51] : memref<2x16xi32, #tpu.memory_space<smem>>
    %76 = arith.index_cast %75 : i32 to index
    %c0_52 = arith.constant 0 : index
    %77 = vector.load %arg3[%76, %c0_52] : memref<15x32xf32, #tpu.memory_space<vmem>>, vector<1x32xf32>
    %c1_53 = arith.constant 1 : index
    %c4_54 = arith.constant 4 : index
    %78 = memref.load %arg1[%c1_53, %c4_54] : memref<2x16xi32, #tpu.memory_space<smem>>
    %79 = arith.index_cast %78 : i32 to index
    %c0_55 = arith.constant 0 : index
    %80 = vector.load %arg3[%79, %c0_55] : memref<15x32xf32, #tpu.memory_space<vmem>>, vector<1x32xf32>
    %c1_56 = arith.constant 1 : index
    %c8_57 = arith.constant 8 : index
    %81 = memref.load %arg1[%c1_56, %c8_57] : memref<2x16xi32, #tpu.memory_space<smem>>
    %82 = arith.index_cast %81 : i32 to index
    %c0_58 = arith.constant 0 : index
    %83 = vector.load %arg3[%82, %c0_58] : memref<15x32xf32, #tpu.memory_space<vmem>>, vector<1x32xf32>
    %c1_59 = arith.constant 1 : index
    %c12_60 = arith.constant 12 : index
    %84 = memref.load %arg1[%c1_59, %c12_60] : memref<2x16xi32, #tpu.memory_space<smem>>
    %85 = arith.index_cast %84 : i32 to index
    %c0_61 = arith.constant 0 : index
    %86 = vector.load %arg3[%85, %c0_61] : memref<15x32xf32, #tpu.memory_space<vmem>>, vector<1x32xf32>
    %c0_62 = arith.constant 0 : index
    %c1_63 = arith.constant 1 : index
    %87 = memref.load %arg1[%c0_62, %c1_63] : memref<2x16xi32, #tpu.memory_space<smem>>
    %88 = arith.index_cast %87 : i32 to index
    %c0_64 = arith.constant 0 : index
    %89 = vector.load %arg3[%88, %c0_64] : memref<15x32xf32, #tpu.memory_space<vmem>>, vector<1x32xf32>
    %c0_65 = arith.constant 0 : index
    %c5_66 = arith.constant 5 : index
    %90 = memref.load %arg1[%c0_65, %c5_66] : memref<2x16xi32, #tpu.memory_space<smem>>
    %91 = arith.index_cast %90 : i32 to index
    %c0_67 = arith.constant 0 : index
    %92 = vector.load %arg3[%91, %c0_67] : memref<15x32xf32, #tpu.memory_space<vmem>>, vector<1x32xf32>
    %c0_68 = arith.constant 0 : index
    %c9 = arith.constant 9 : index
    %93 = memref.load %arg1[%c0_68, %c9] : memref<2x16xi32, #tpu.memory_space<smem>>
    %94 = arith.index_cast %93 : i32 to index
    %c0_69 = arith.constant 0 : index
    %95 = vector.load %arg3[%94, %c0_69] : memref<15x32xf32, #tpu.memory_space<vmem>>, vector<1x32xf32>
    %c0_70 = arith.constant 0 : index
    %c13 = arith.constant 13 : index
    %96 = memref.load %arg1[%c0_70, %c13] : memref<2x16xi32, #tpu.memory_space<smem>>
    %97 = arith.index_cast %96 : i32 to index
    %c0_71 = arith.constant 0 : index
    %98 = vector.load %arg3[%97, %c0_71] : memref<15x32xf32, #tpu.memory_space<vmem>>, vector<1x32xf32>
    %c1_72 = arith.constant 1 : index
    %c1_73 = arith.constant 1 : index
    %99 = memref.load %arg1[%c1_72, %c1_73] : memref<2x16xi32, #tpu.memory_space<smem>>
    %100 = arith.index_cast %99 : i32 to index
    %c0_74 = arith.constant 0 : index
    %101 = vector.load %arg3[%100, %c0_74] : memref<15x32xf32, #tpu.memory_space<vmem>>, vector<1x32xf32>
    %c1_75 = arith.constant 1 : index
    %c5_76 = arith.constant 5 : index
    %102 = memref.load %arg1[%c1_75, %c5_76] : memref<2x16xi32, #tpu.memory_space<smem>>
    %103 = arith.index_cast %102 : i32 to index
    %c0_77 = arith.constant 0 : index
    %104 = vector.load %arg3[%103, %c0_77] : memref<15x32xf32, #tpu.memory_space<vmem>>, vector<1x32xf32>
    %c1_78 = arith.constant 1 : index
    %c9_79 = arith.constant 9 : index
    %105 = memref.load %arg1[%c1_78, %c9_79] : memref<2x16xi32, #tpu.memory_space<smem>>
    %106 = arith.index_cast %105 : i32 to index
    %c0_80 = arith.constant 0 : index
    %107 = vector.load %arg3[%106, %c0_80] : memref<15x32xf32, #tpu.memory_space<vmem>>, vector<1x32xf32>
    %c1_81 = arith.constant 1 : index
    %c13_82 = arith.constant 13 : index
    %108 = memref.load %arg1[%c1_81, %c13_82] : memref<2x16xi32, #tpu.memory_space<smem>>
    %109 = arith.index_cast %108 : i32 to index
    %c0_83 = arith.constant 0 : index
    %110 = vector.load %arg3[%109, %c0_83] : memref<15x32xf32, #tpu.memory_space<vmem>>, vector<1x32xf32>
    %c0_84 = arith.constant 0 : index
    %c2_85 = arith.constant 2 : index
    %111 = memref.load %arg1[%c0_84, %c2_85] : memref<2x16xi32, #tpu.memory_space<smem>>
    %112 = arith.index_cast %111 : i32 to index
    %c0_86 = arith.constant 0 : index
    %113 = vector.load %arg3[%112, %c0_86] : memref<15x32xf32, #tpu.memory_space<vmem>>, vector<1x32xf32>
    %c0_87 = arith.constant 0 : index
    %c6_88 = arith.constant 6 : index
    %114 = memref.load %arg1[%c0_87, %c6_88] : memref<2x16xi32, #tpu.memory_space<smem>>
    %115 = arith.index_cast %114 : i32 to index
    %c0_89 = arith.constant 0 : index
    %116 = vector.load %arg3[%115, %c0_89] : memref<15x32xf32, #tpu.memory_space<vmem>>, vector<1x32xf32>
    %c0_90 = arith.constant 0 : index
    %c10 = arith.constant 10 : index
    %117 = memref.load %arg1[%c0_90, %c10] : memref<2x16xi32, #tpu.memory_space<smem>>
    %118 = arith.index_cast %117 : i32 to index
    %c0_91 = arith.constant 0 : index
    %119 = vector.load %arg3[%118, %c0_91] : memref<15x32xf32, #tpu.memory_space<vmem>>, vector<1x32xf32>
    %c0_92 = arith.constant 0 : index
    %c14 = arith.constant 14 : index
    %120 = memref.load %arg1[%c0_92, %c14] : memref<2x16xi32, #tpu.memory_space<smem>>
    %121 = arith.index_cast %120 : i32 to index
    %c0_93 = arith.constant 0 : index
    %122 = vector.load %arg3[%121, %c0_93] : memref<15x32xf32, #tpu.memory_space<vmem>>, vector<1x32xf32>
    %c1_94 = arith.constant 1 : index
    %c2_95 = arith.constant 2 : index
    %123 = memref.load %arg1[%c1_94, %c2_95] : memref<2x16xi32, #tpu.memory_space<smem>>
    %124 = arith.index_cast %123 : i32 to index
    %c0_96 = arith.constant 0 : index
    %125 = vector.load %arg3[%124, %c0_96] : memref<15x32xf32, #tpu.memory_space<vmem>>, vector<1x32xf32>
    %c1_97 = arith.constant 1 : index
    %c6_98 = arith.constant 6 : index
    %126 = memref.load %arg1[%c1_97, %c6_98] : memref<2x16xi32, #tpu.memory_space<smem>>
    %127 = arith.index_cast %126 : i32 to index
    %c0_99 = arith.constant 0 : index
    %128 = vector.load %arg3[%127, %c0_99] : memref<15x32xf32, #tpu.memory_space<vmem>>, vector<1x32xf32>
    %c1_100 = arith.constant 1 : index
    %c10_101 = arith.constant 10 : index
    %129 = memref.load %arg1[%c1_100, %c10_101] : memref<2x16xi32, #tpu.memory_space<smem>>
    %130 = arith.index_cast %129 : i32 to index
    %c0_102 = arith.constant 0 : index
    %131 = vector.load %arg3[%130, %c0_102] : memref<15x32xf32, #tpu.memory_space<vmem>>, vector<1x32xf32>
    %c1_103 = arith.constant 1 : index
    %c14_104 = arith.constant 14 : index
    %132 = memref.load %arg1[%c1_103, %c14_104] : memref<2x16xi32, #tpu.memory_space<smem>>
    %133 = arith.index_cast %132 : i32 to index
    %c0_105 = arith.constant 0 : index
    %134 = vector.load %arg3[%133, %c0_105] : memref<15x32xf32, #tpu.memory_space<vmem>>, vector<1x32xf32>
    %c0_106 = arith.constant 0 : index
    %c3_107 = arith.constant 3 : index
    %135 = memref.load %arg1[%c0_106, %c3_107] : memref<2x16xi32, #tpu.memory_space<smem>>
    %136 = arith.index_cast %135 : i32 to index
    %c0_108 = arith.constant 0 : index
    %137 = vector.load %arg3[%136, %c0_108] : memref<15x32xf32, #tpu.memory_space<vmem>>, vector<1x32xf32>
    %c0_109 = arith.constant 0 : index
    %c7_110 = arith.constant 7 : index
    %138 = memref.load %arg1[%c0_109, %c7_110] : memref<2x16xi32, #tpu.memory_space<smem>>
    %139 = arith.index_cast %138 : i32 to index
    %c0_111 = arith.constant 0 : index
    %140 = vector.load %arg3[%139, %c0_111] : memref<15x32xf32, #tpu.memory_space<vmem>>, vector<1x32xf32>
    %c0_112 = arith.constant 0 : index
    %c11 = arith.constant 11 : index
    %141 = memref.load %arg1[%c0_112, %c11] : memref<2x16xi32, #tpu.memory_space<smem>>
    %142 = arith.index_cast %141 : i32 to index
    %c0_113 = arith.constant 0 : index
    %143 = vector.load %arg3[%142, %c0_113] : memref<15x32xf32, #tpu.memory_space<vmem>>, vector<1x32xf32>
    %c0_114 = arith.constant 0 : index
    %c15 = arith.constant 15 : index
    %144 = memref.load %arg1[%c0_114, %c15] : memref<2x16xi32, #tpu.memory_space<smem>>
    %145 = arith.index_cast %144 : i32 to index
    %c0_115 = arith.constant 0 : index
    %146 = vector.load %arg3[%145, %c0_115] : memref<15x32xf32, #tpu.memory_space<vmem>>, vector<1x32xf32>
    %c1_116 = arith.constant 1 : index
    %c3_117 = arith.constant 3 : index
    %147 = memref.load %arg1[%c1_116, %c3_117] : memref<2x16xi32, #tpu.memory_space<smem>>
    %148 = arith.index_cast %147 : i32 to index
    %c0_118 = arith.constant 0 : index
    %149 = vector.load %arg3[%148, %c0_118] : memref<15x32xf32, #tpu.memory_space<vmem>>, vector<1x32xf32>
    %c1_119 = arith.constant 1 : index
    %c7_120 = arith.constant 7 : index
    %150 = memref.load %arg1[%c1_119, %c7_120] : memref<2x16xi32, #tpu.memory_space<smem>>
    %151 = arith.index_cast %150 : i32 to index
    %c0_121 = arith.constant 0 : index
    %152 = vector.load %arg3[%151, %c0_121] : memref<15x32xf32, #tpu.memory_space<vmem>>, vector<1x32xf32>
    %c1_122 = arith.constant 1 : index
    %c11_123 = arith.constant 11 : index
    %153 = memref.load %arg1[%c1_122, %c11_123] : memref<2x16xi32, #tpu.memory_space<smem>>
    %154 = arith.index_cast %153 : i32 to index
    %c0_124 = arith.constant 0 : index
    %155 = vector.load %arg3[%154, %c0_124] : memref<15x32xf32, #tpu.memory_space<vmem>>, vector<1x32xf32>
    %c1_125 = arith.constant 1 : index
    %c15_126 = arith.constant 15 : index
    %156 = memref.load %arg1[%c1_125, %c15_126] : memref<2x16xi32, #tpu.memory_space<smem>>
    %157 = arith.index_cast %156 : i32 to index
    %c0_127 = arith.constant 0 : index
    %158 = vector.load %arg3[%157, %c0_127] : memref<15x32xf32, #tpu.memory_space<vmem>>, vector<1x32xf32>
    %159 = tpu.concatenate %65, %68, %71, %74, %77, %80, %83, %86, %89, %92, %95, %98, %101, %104, %107, %110 in 0 : vector<1x32xf32>, vector<1x32xf32>, vector<1x32xf32>, vector<1x32xf32>, vector<1x32xf32>, vector<1x32xf32>, vector<1x32xf32>, vector<1x32xf32>, vector<1x32xf32>, vector<1x32xf32>, vector<1x32xf32>, vector<1x32xf32>, vector<1x32xf32>, vector<1x32xf32>, vector<1x32xf32>, vector<1x32xf32> -> vector<16x32xf32>
    %160 = tpu.concatenate %113, %116, %119, %122, %125, %128, %131, %134, %137, %140, %143, %146, %149, %152, %155, %158 in 0 : vector<1x32xf32>, vector<1x32xf32>, vector<1x32xf32>, vector<1x32xf32>, vector<1x32xf32>, vector<1x32xf32>, vector<1x32xf32>, vector<1x32xf32>, vector<1x32xf32>, vector<1x32xf32>, vector<1x32xf32>, vector<1x32xf32>, vector<1x32xf32>, vector<1x32xf32>, vector<1x32xf32>, vector<1x32xf32> -> vector<16x32xf32>
    %161 = tpu.concatenate %159, %160 in 0 : vector<16x32xf32>, vector<16x32xf32> -> vector<32x32xf32>
    %162 = vector.shape_cast %161 : vector<32x32xf32> to vector<4x8x32xf32>
    %163 = vector.shape_cast %62 : vector<8x32xf32> to vector<1x8x32xf32>
    %164 = vector.broadcast %163 : vector<1x8x32xf32> to vector<4x8x32xf32>
    %165 = arith.mulf %162, %164 : vector<4x8x32xf32>
    %cst = arith.constant dense<0.000000e+00> : vector<4x8xf32>
    %166 = vector.multi_reduction <add>, %165, %cst [2] : vector<4x8x32xf32> to vector<4x8xf32>
    %167 = arith.negf %166 : vector<4x8xf32>
    %168 = math.exp %167 : vector<4x8xf32>
    %cst_128 = arith.constant 1.000000e+00 : f32
    %169 = vector.broadcast %cst_128 : f32 to vector<4x8xf32>
    %170 = arith.addf %169, %168 : vector<4x8xf32>
    %171 = arith.divf %169, %170 : vector<4x8xf32>
    %172 = vector.extract_strided_slice %171 {offsets = [0, 0], sizes = [3, 8], strides = [1, 1]} : vector<4x8xf32> to vector<3x8xf32>
    %173 = vector.extract_strided_slice %171 {offsets = [3, 0], sizes = [1, 8], strides = [1, 1]} : vector<4x8xf32> to vector<1x8xf32>
    %c0_129 = arith.constant 0 : index
    %c0_130 = arith.constant 0 : index
    %174 = vector.load %arg4[%c0_129, %c0_130] : memref<3x8xf32, #tpu.memory_space<vmem>>, vector<3x8xf32>
    %cst_131 = arith.constant 0.000000e+00 : f32
    %175 = vector.broadcast %cst_131 : f32 to vector<3x8xf32>
    %176 = arith.cmpf one, %174, %175 : vector<3x8xf32>
    %cst_132 = arith.constant 2.000000e+00 : f32
    %177 = vector.broadcast %cst_132 : f32 to vector<3x8xf32>
    %178 = arith.mulf %177, %172 : vector<3x8xf32>
    %cst_133 = arith.constant 1.000000e+00 : f32
    %179 = vector.broadcast %cst_133 : f32 to vector<3x8xf32>
    %180 = arith.select %176, %178, %179 : vector<3x8xi1>, vector<3x8xf32>
    %181 = arith.subf %180, %172 : vector<3x8xf32>
    %cst_134 = arith.constant 1.000000e+00 : f32
    %182 = vector.broadcast %cst_134 : f32 to vector<1x8xf32>
    %183 = arith.subf %182, %173 : vector<1x8xf32>
    %184 = vector.extract_strided_slice %181 {offsets = [0, 0], sizes = [1, 8], strides = [1, 1]} : vector<3x8xf32> to vector<1x8xf32>
    %185 = arith.mulf %183, %184 : vector<1x8xf32>
    %186 = vector.extract_strided_slice %181 {offsets = [1, 0], sizes = [1, 8], strides = [1, 1]} : vector<3x8xf32> to vector<1x8xf32>
    %187 = arith.mulf %185, %186 : vector<1x8xf32>
    %188 = vector.extract_strided_slice %181 {offsets = [2, 0], sizes = [1, 8], strides = [1, 1]} : vector<3x8xf32> to vector<1x8xf32>
    %189 = arith.mulf %187, %188 : vector<1x8xf32>
    %c0_135 = arith.constant 0 : index
    %c0_136 = arith.constant 0 : index
    %190 = vector.load %arg5[%c0_135, %c0_136] : memref<1x8xf32, #tpu.memory_space<vmem>>, vector<1x8xf32>
    %191 = arith.mulf %189, %190 : vector<1x8xf32>
    %192 = vector.shape_cast %191 : vector<1x8xf32> to vector<1x1x8xf32>
    %cst_137 = arith.constant dense<0.000000e+00> : vector<1xf32>
    %193 = vector.multi_reduction <add>, %192, %cst_137 [1, 2] : vector<1x1x8xf32> to vector<1xf32>
    %194 = vector.shape_cast %193 : vector<1xf32> to vector<1x1x1xf32>
    %195 = vector.extract %194[0, 0, 0] : f32 from vector<1x1x1xf32>
    %196 = vector.broadcast %195 : f32 to vector<1x1xf32>
    %cst_138 = arith.constant 0.000000e+00 : f32
    %197 = vector.broadcast %cst_138 : f32 to vector<1x1xf32>
    %198 = arith.subf %197, %196 : vector<1x1xf32>
    %cst_139 = arith.constant 2.000000e+00 : f32
    %199 = vector.broadcast %cst_139 : f32 to vector<1x1xf32>
    %200 = arith.divf %198, %199 : vector<1x1xf32>
    %c0_140 = arith.constant 0 : index
    %c0_141 = arith.constant 0 : index
    %201 = vector.load %arg6[%c0_140, %c0_141] : memref<1x1xf32, #tpu.memory_space<vmem>>, vector<1x1xf32>
    tpu.vector_store %arg6[%c0_140, %c0_141], %200 {strides = array<i32>} : memref<1x1xf32, #tpu.memory_space<vmem>>, vector<1x1xf32>,
    return
  }
}

</mosaic_0001>

<llo_original>
// kernel: poi2vec_loss.1
$region0: #{poi2vec_loss.1}
  #allocation0 [shape = 'u32[]', space=smem, size = 0x4, offset = 0x4, fixed_abs, tag = 'smem constant byte address 0x4 - core index']
  #allocation1 [shape = 'u32[144,128]{1,0:T(1,128)}', space=vmem, size = 0x12000, scoped, tag = 'internal scratch']
  %s0 = inlined_call_operand.vmem [shape: s32[2,8], index: 0, kind: input, shape index: {}]
  %s1 = inlined_call_operand.vmem [shape: s32[2,16], index: 1, kind: input, shape index: {}]
  %s2 = inlined_call_operand.vmem [shape: f32[50,32], index: 2, kind: input, shape index: {}]
  %s3 = inlined_call_operand.vmem [shape: f32[15,32], index: 3, kind: input, shape index: {}]
  %s4 = inlined_call_operand.vmem [shape: f32[3,8], index: 4, kind: input, shape index: {}]
  %s5 = inlined_call_operand.vmem [shape: f32[1,8], index: 5, kind: input, shape index: {}]
  %s6 = inlined_call_operand.hbm [shape: f32[1,1], index: 6, kind: output, shape index: {}]
  %s7 = sld [smem:[#allocation0]]
  $region42: #{poi2vec_loss.1} parent=0
    _
  %s9 = ssub.s32 1, %s7
  %s10 = scalar_select 0, %s9, %s7
  $region1: #{poi2vec_loss.1} parent=0
    #allocation2 [shape = 'u8[1024]{0}', space=smem, size = 0x400, scoped, tag = 'input window, operand 0, single buffered']
    #allocation3 [shape = 's32[1]{0}', space=sflag, size = 0x4, scoped, tag = 'scoped memory for poi2vec_loss.1']
    #allocation4 [shape = 's32[1]{0}', space=sflag, size = 0x4, scoped, tag = 'scoped memory for poi2vec_loss.1']
    #allocation5 [shape = 'u8[1024]{0}', space=smem, size = 0x400, scoped, tag = 'input window, operand 1, single buffered']
    #allocation6 [shape = 's32[1]{0}', space=sflag, size = 0x4, scoped, tag = 'scoped memory for poi2vec_loss.1']
    #allocation7 [shape = 'u8[512]{0}', space=vmem, size = 0x400, scoped, tag = 'output window, operand 0, single buffered']
    %11 = vsyncpa [#allocation4], 0
    %12 = vsyncpa [#allocation6], 0
    %13 = vsyncpa [#allocation3], 0
    // Predicated region
    $region2: #{poi2vec_loss.1} parent=1 // pred_check
      _
    $region3: #{poi2vec_loss.1} parent=1 // pred_check_branch
      %15 = sbr.rel (0) target = $region5
    $region4: #{poi2vec_loss.1} parent=1 // pred_region
      %s17 = ssub.s32 32, 32
      %18 = vsyncadd [#allocation4], %s17
      %s20 = sshll.u32 %s0, 4
      %s21 = int_to_ptr.vmem [resolvable:$true] %s20
      %23 = dma.vmem_to_smem %s21, 32, [#allocation2], [#allocation4]
    $region5: #{poi2vec_loss.1} parent=1 // pred_fallthru
      _
    // Predicated region
    $region6: #{poi2vec_loss.1} parent=1 // pred_check
      _
    $region7: #{poi2vec_loss.1} parent=1 // pred_check_branch
      %25 = sbr.rel (0) target = $region9
    $region8: #{poi2vec_loss.1} parent=1 // pred_region
      %s27 = ssub.s32 32, 32
      %28 = vsyncadd [#allocation6], %s27
      %s30 = sshll.u32 %s1, 4
      %s31 = int_to_ptr.vmem [resolvable:$true] %s30
      %33 = dma.vmem_to_smem %s31, 32, [#allocation5], [#allocation6]
    $region9: #{poi2vec_loss.1} parent=1 // pred_fallthru
      _
    // Predicated region
    $region10: #{poi2vec_loss.1} parent=1 // pred_check
      _
    $region11: #{poi2vec_loss.1} parent=1 // pred_check_branch
      %35 = sbr.rel (0) target = $region13
    $region12: #{poi2vec_loss.1} parent=1 // pred_region
      _
    $region13: #{poi2vec_loss.1} parent=1 // pred_fallthru
      _
    // Predicated region
    $region14: #{poi2vec_loss.1} parent=1 // pred_check
      _
    $region15: #{poi2vec_loss.1} parent=1 // pred_check_branch
      %37 = sbr.rel (0) target = $region17
    $region16: #{poi2vec_loss.1} parent=1 // pred_region
      _
    $region17: #{poi2vec_loss.1} parent=1 // pred_fallthru
      _
    // Predicated region
    $region18: #{poi2vec_loss.1} parent=1 // pred_check
      _
    $region19: #{poi2vec_loss.1} parent=1 // pred_check_branch
      %39 = sbr.rel (0) target = $region21
    $region20: #{poi2vec_loss.1} parent=1 // pred_region
      _
    $region21: #{poi2vec_loss.1} parent=1 // pred_fallthru
      _
    // Predicated region
    $region22: #{poi2vec_loss.1} parent=1 // pred_check
      _
    $region23: #{poi2vec_loss.1} parent=1 // pred_check_branch
      %41 = sbr.rel (0) target = $region25
    $region24: #{poi2vec_loss.1} parent=1 // pred_region
      _
    $region25: #{poi2vec_loss.1} parent=1 // pred_fallthru
      _
    // Predicated region
    $region26: #{poi2vec_loss.1} parent=1 // pred_check
      _
    $region27: #{poi2vec_loss.1} parent=1 // pred_check_branch
      %43 = sbr.rel (0) target = $region29
    $region28: #{poi2vec_loss.1} parent=1 // pred_region
      %44 = dma.done [#allocation4], 32
    $region29: #{poi2vec_loss.1} parent=1 // pred_fallthru
      _
    // Predicated region
    $region30: #{poi2vec_loss.1} parent=1 // pred_check
      _
    $region31: #{poi2vec_loss.1} parent=1 // pred_check_branch
      %46 = sbr.rel (0) target = $region33
    $region32: #{poi2vec_loss.1} parent=1 // pred_region
      %47 = dma.done [#allocation6], 32
    $region33: #{poi2vec_loss.1} parent=1 // pred_fallthru
      _
    %48 = sfence
    %s49 = sld [smem:[#allocation2]]
    %s50 = scalar_lea.vmem %s2, %s49
    %v51 = vld [vmem:[%s50] sm:$0x1]
    %s52 = sld [smem:[#allocation2 + $0x1]]
    %s53 = scalar_lea.vmem %s2, %s52
    %v54 = vld [vmem:[%s53] sm:$0x1]
    %v55 = vadd.f32 %v51, %v54
    %s56 = sld [smem:[#allocation2 + $0x2]]
    %s57 = scalar_lea.vmem %s2, %s56
    %v58 = vld [vmem:[%s57] sm:$0x1]
    %v59 = vadd.f32 %v55, %v58
    %s60 = sld [smem:[#allocation2 + $0x3]]
    %s61 = scalar_lea.vmem %s2, %s60
    %v62 = vld [vmem:[%s61] sm:$0x1]
    %v63 = vadd.f32 %v59, %v62
    %s64 = sld [smem:[#allocation2 + $0x4]]
    %s65 = scalar_lea.vmem %s2, %s64
    %v66 = vld [vmem:[%s65] sm:$0x1]
    %v67 = vadd.f32 %v63, %v66
    %s68 = sld [smem:[#allocation2 + $0x5]]
    %s69 = scalar_lea.vmem %s2, %s68
    %v70 = vld [vmem:[%s69] sm:$0x1]
    %v71 = vadd.f32 %v67, %v70
    %s72 = sld [smem:[#allocation2 + $0x6]]
    %s73 = scalar_lea.vmem %s2, %s72
    %v74 = vld [vmem:[%s73] sm:$0x1]
    %v75 = vadd.f32 %v71, %v74
    %s76 = sld [smem:[#allocation2 + $0x7]]
    %s77 = scalar_lea.vmem %s2, %s76
    %v78 = vld [vmem:[%s77] sm:$0x1]
    %v79 = vadd.f32 %v75, %v78
    %s80 = sld [smem:[#allocation2 + $0x80]]
    %s81 = scalar_lea.vmem %s2, %s80
    %v82 = vld [vmem:[%s81] sm:$0x1]
    %s83 = sld [smem:[#allocation2 + $0x81]]
    %s84 = scalar_lea.vmem %s2, %s83
    %v85 = vld [vmem:[%s84] sm:$0x1]
    %v86 = vadd.f32 %v82, %v85
    %s87 = sld [smem:[#allocation2 + $0x82]]
    %s88 = scalar_lea.vmem %s2, %s87
    %v89 = vld [vmem:[%s88] sm:$0x1]
    %v90 = vadd.f32 %v86, %v89
    %s91 = sld [smem:[#allocation2 + $0x83]]
    %s92 = scalar_lea.vmem %s2, %s91
    %v93 = vld [vmem:[%s92] sm:$0x1]
    %v94 = vadd.f32 %v90, %v93
    %s95 = sld [smem:[#allocation2 + $0x84]]
    %s96 = scalar_lea.vmem %s2, %s95
    %v97 = vld [vmem:[%s96] sm:$0x1]
    %v98 = vadd.f32 %v94, %v97
    %s99 = sld [smem:[#allocation2 + $0x85]]
    %s100 = scalar_lea.vmem %s2, %s99
    %v101 = vld [vmem:[%s100] sm:$0x1]
    %v102 = vadd.f32 %v98, %v101
    %s103 = sld [smem:[#allocation2 + $0x86]]
    %s104 = scalar_lea.vmem %s2, %s103
    %v105 = vld [vmem:[%s104] sm:$0x1]
    %v106 = vadd.f32 %v102, %v105
    %s107 = sld [smem:[#allocation2 + $0x87]]
    %s108 = scalar_lea.vmem %s2, %s107
    %v109 = vld [vmem:[%s108] sm:$0x1]
    %v110 = vadd.f32 %v106, %v109
    %v112 = vrot.slane %v79, 7
    %v114 = vrot.slane %v79, 6
    %v116 = vrot.slane %v79, 5
    %v119 = vrot.slane %v110, 4
    %v121 = vrot.slane %v110, 3
    %v123 = vrot.slane %v110, 2
    %v125 = vrot.slane %v110, 1
    %vm127 = vcmask 1040384
    %v128 = vsel %vm127, %v79, %v112
    %vm129 = vcmask 1041408
    %v130 = vsel %vm129, %v128, %v114
    %vm131 = vcmask 1042432
    %v132 = vsel %vm131, %v130, %v116
    %vm133 = vcmask 1043456
    %v134 = vsel %vm133, %v132, %v119
    %vm135 = vcmask 1044480
    %v136 = vsel %vm135, %v134, %v121
    %vm137 = vcmask 1045504
    %v138 = vsel %vm137, %v136, %v123
    %vm139 = vcmask 1046528
    %v140 = vsel %vm139, %v138, %v125
    %s141 = sld [smem:[#allocation5]]
    %s142 = scalar_lea.vmem %s3, %s141
    %v143 = vld [vmem:[%s142] sm:$0x1]
    %s144 = sld [smem:[#allocation5 + $0x4]]
    %s145 = scalar_lea.vmem %s3, %s144
    %v146 = vld [vmem:[%s145] sm:$0x1]
    %s147 = sld [smem:[#allocation5 + $0x8]]
    %s148 = scalar_lea.vmem %s3, %s147
    %v149 = vld [vmem:[%s148] sm:$0x1]
    %s150 = sld [smem:[#allocation5 + $0xc]]
    %s151 = scalar_lea.vmem %s3, %s150
    %v152 = vld [vmem:[%s151] sm:$0x1]
    %s153 = sld [smem:[#allocation5 + $0x80]]
    %s154 = scalar_lea.vmem %s3, %s153
    %v155 = vld [vmem:[%s154] sm:$0x1]
    %s156 = sld [smem:[#allocation5 + $0x84]]
    %s157 = scalar_lea.vmem %s3, %s156
    %v158 = vld [vmem:[%s157] sm:$0x1]
    %s159 = sld [smem:[#allocation5 + $0x88]]
    %s160 = scalar_lea.vmem %s3, %s159
    %v161 = vld [vmem:[%s160] sm:$0x1]
    %s162 = sld [smem:[#allocation5 + $0x8c]]
    %s163 = scalar_lea.vmem %s3, %s162
    %v164 = vld [vmem:[%s163] sm:$0x1]
    %s165 = sld [smem:[#allocation5 + $0x1]]
    %s166 = scalar_lea.vmem %s3, %s165
    %v167 = vld [vmem:[%s166] sm:$0x1]
    %s168 = sld [smem:[#allocation5 + $0x5]]
    %s169 = scalar_lea.vmem %s3, %s168
    %v170 = vld [vmem:[%s169] sm:$0x1]
    %s171 = sld [smem:[#allocation5 + $0x9]]
    %s172 = scalar_lea.vmem %s3, %s171
    %v173 = vld [vmem:[%s172] sm:$0x1]
    %s174 = sld [smem:[#allocation5 + $0xd]]
    %s175 = scalar_lea.vmem %s3, %s174
    %v176 = vld [vmem:[%s175] sm:$0x1]
    %s177 = sld [smem:[#allocation5 + $0x81]]
    %s178 = scalar_lea.vmem %s3, %s177
    %v179 = vld [vmem:[%s178] sm:$0x1]
    %s180 = sld [smem:[#allocation5 + $0x85]]
    %s181 = scalar_lea.vmem %s3, %s180
    %v182 = vld [vmem:[%s181] sm:$0x1]
    %s183 = sld [smem:[#allocation5 + $0x89]]
    %s184 = scalar_lea.vmem %s3, %s183
    %v185 = vld [vmem:[%s184] sm:$0x1]
    %s186 = sld [smem:[#allocation5 + $0x8d]]
    %s187 = scalar_lea.vmem %s3, %s186
    %v188 = vld [vmem:[%s187] sm:$0x1]
    %s189 = sld [smem:[#allocation5 + $0x2]]
    %s190 = scalar_lea.vmem %s3, %s189
    %v191 = vld [vmem:[%s190] sm:$0x1]
    %s192 = sld [smem:[#allocation5 + $0x6]]
    %s193 = scalar_lea.vmem %s3, %s192
    %v194 = vld [vmem:[%s193] sm:$0x1]
    %s195 = sld [smem:[#allocation5 + $0xa]]
    %s196 = scalar_lea.vmem %s3, %s195
    %v197 = vld [vmem:[%s196] sm:$0x1]
    %s198 = sld [smem:[#allocation5 + $0xe]]
    %s199 = scalar_lea.vmem %s3, %s198
    %v200 = vld [vmem:[%s199] sm:$0x1]
    %s201 = sld [smem:[#allocation5 + $0x82]]
    %s202 = scalar_lea.vmem %s3, %s201
    %v203 = vld [vmem:[%s202] sm:$0x1]
    %s204 = sld [smem:[#allocation5 + $0x86]]
    %s205 = scalar_lea.vmem %s3, %s204
    %v206 = vld [vmem:[%s205] sm:$0x1]
    %s207 = sld [smem:[#allocation5 + $0x8a]]
    %s208 = scalar_lea.vmem %s3, %s207
    %v209 = vld [vmem:[%s208] sm:$0x1]
    %s210 = sld [smem:[#allocation5 + $0x8e]]
    %s211 = scalar_lea.vmem %s3, %s210
    %v212 = vld [vmem:[%s211] sm:$0x1]
    %s213 = sld [smem:[#allocation5 + $0x3]]
    %s214 = scalar_lea.vmem %s3, %s213
    %v215 = vld [vmem:[%s214] sm:$0x1]
    %s216 = sld [smem:[#allocation5 + $0x7]]
    %s217 = scalar_lea.vmem %s3, %s216
    %v218 = vld [vmem:[%s217] sm:$0x1]
    %s219 = sld [smem:[#allocation5 + $0xb]]
    %s220 = scalar_lea.vmem %s3, %s219
    %v221 = vld [vmem:[%s220] sm:$0x1]
    %s222 = sld [smem:[#allocation5 + $0xf]]
    %s223 = scalar_lea.vmem %s3, %s222
    %v224 = vld [vmem:[%s223] sm:$0x1]
    %s225 = sld [smem:[#allocation5 + $0x83]]
    %s226 = scalar_lea.vmem %s3, %s225
    %v227 = vld [vmem:[%s226] sm:$0x1]
    %s228 = sld [smem:[#allocation5 + $0x87]]
    %s229 = scalar_lea.vmem %s3, %s228
    %v230 = vld [vmem:[%s229] sm:$0x1]
    %s231 = sld [smem:[#allocation5 + $0x8b]]
    %s232 = scalar_lea.vmem %s3, %s231
    %v233 = vld [vmem:[%s232] sm:$0x1]
    %s234 = sld [smem:[#allocation5 + $0x8f]]
    %s235 = scalar_lea.vmem %s3, %s234
    %v236 = vld [vmem:[%s235] sm:$0x1]
    %v238 = vrot.slane %v146, 7
    %v241 = vrot.slane %v149, 6
    %v244 = vrot.slane %v152, 5
    %v247 = vrot.slane %v155, 4
    %v250 = vrot.slane %v158, 3
    %v253 = vrot.slane %v161, 2
    %v256 = vrot.slane %v164, 1
    %v259 = vrot.slane %v170, 7
    %v262 = vrot.slane %v173, 6
    %v265 = vrot.slane %v176, 5
    %v268 = vrot.slane %v179, 4
    %v271 = vrot.slane %v182, 3
    %v274 = vrot.slane %v185, 2
    %v277 = vrot.slane %v188, 1
    %v279 = vsel %vm127, %v143, %v238
    %v280 = vsel %vm129, %v279, %v241
    %v281 = vsel %vm131, %v280, %v244
    %v282 = vsel %vm133, %v281, %v247
    %v283 = vsel %vm135, %v282, %v250
    %v284 = vsel %vm137, %v283, %v253
    %v285 = vsel %vm139, %v284, %v256
    %v286 = vsel %vm127, %v167, %v259
    %v287 = vsel %vm129, %v286, %v262
    %v288 = vsel %vm131, %v287, %v265
    %v289 = vsel %vm133, %v288, %v268
    %v290 = vsel %vm135, %v289, %v271
    %v291 = vsel %vm137, %v290, %v274
    %v292 = vsel %vm139, %v291, %v277
    %v294 = vrot.slane %v194, 7
    %v297 = vrot.slane %v197, 6
    %v300 = vrot.slane %v200, 5
    %v303 = vrot.slane %v203, 4
    %v306 = vrot.slane %v206, 3
    %v309 = vrot.slane %v209, 2
    %v312 = vrot.slane %v212, 1
    %v315 = vrot.slane %v218, 7
    %v318 = vrot.slane %v221, 6
    %v321 = vrot.slane %v224, 5
    %v324 = vrot.slane %v227, 4
    %v327 = vrot.slane %v230, 3
    %v330 = vrot.slane %v233, 2
    %v333 = vrot.slane %v236, 1
    %v335 = vsel %vm127, %v191, %v294
    %v336 = vsel %vm129, %v335, %v297
    %v337 = vsel %vm131, %v336, %v300
    %v338 = vsel %vm133, %v337, %v303
    %v339 = vsel %vm135, %v338, %v306
    %v340 = vsel %vm137, %v339, %v309
    %v341 = vsel %vm139, %v340, %v312
    %v342 = vsel %vm127, %v215, %v315
    %v343 = vsel %vm129, %v342, %v318
    %v344 = vsel %vm131, %v343, %v321
    %v345 = vsel %vm133, %v344, %v324
    %v346 = vsel %vm135, %v345, %v327
    %v347 = vsel %vm137, %v346, %v330
    %v348 = vsel %vm139, %v347, %v333
    %v349 = vmul.f32 %v285, %v140
    %v350 = vmul.f32 %v292, %v140
    %v351 = vmul.f32 %v341, %v140
    %v352 = vmul.f32 %v348, %v140
    %vm353 = vcmask 261120
    %v354 = vsel %vm353, %v349, 0.0
    %355 = vadd.xlane.f32.xlu0 %v354
    %v356 = vpop.xlane.xlu0 %355
    %v357 = vsel %vm353, %v350, 0.0
    %358 = vadd.xlane.f32.xlu0 %v357
    %v359 = vpop.xlane.xlu0 %358
    %v360 = vsel %vm353, %v351, 0.0
    %361 = vadd.xlane.f32.xlu0 %v360
    %v362 = vpop.xlane.xlu0 %361
    %v363 = vsel %vm353, %v352, 0.0
    %364 = vadd.xlane.f32.xlu0 %v363
    %v365 = vpop.xlane.xlu0 %364
    %v366 = vxor.u32 %v356, 2147483648
    %v367 = vxor.u32 %v359, 2147483648
    %v368 = vxor.u32 %v362, 2147483648
    %v369 = vxor.u32 %v365, 2147483648
    %v370 = vmul.f32 %v366, 1.442695
    %v371 = vpow.pop %v370
    %v372 = vmul.f32 %v367, 1.442695
    %v373 = vpow.pop %v372
    %v374 = vmul.f32 %v368, 1.442695
    %v375 = vpow.pop %v374
    %v376 = vmul.f32 %v369, 1.442695
    %v377 = vpow.pop %v376
    %v378 = vadd.f32 %v371, 1.0
    %v379 = vadd.f32 %v373, 1.0
    %v380 = vadd.f32 %v375, 1.0
    %v381 = vadd.f32 %v377, 1.0
    %v382 = vrcp.pop %v378
    %v383 = vmul.f32 1.0, %v382
    %v384 = vrcp.pop %v379
    %v385 = vmul.f32 1.0, %v384
    %v386 = vrcp.pop %v380
    %v387 = vmul.f32 1.0, %v386
    %v388 = vrcp.pop %v381
    %v389 = vmul.f32 1.0, %v388
    %v390 = vld [vmem:[%s4] sm:$0x7]
    %vm391 = vcmp.ne.f32.partialorder %v390, 0.0
    %v392 = vmul.f32 %v383, 2.0
    %v393 = vmul.f32 %v385, 2.0
    %v394 = vmul.f32 %v387, 2.0
    %v398 = vlaneseq
    %v399 = vand.u32 %v398, 127
    %v400 = vlaneseq
    %v401 = vshrl.u32 %v400, 7
    %v402 = vsub.s32 %v399, %v401
    %v403 = vrot.slane %v392, %v402
    %v404 = vlaneseq
    %v405 = vshrl.u32 %v404, 7
    %v406 = vsub.s32 %v399, %v405
    %v407 = vrot.slane %v393, %v406
    %v408 = vlaneseq
    %v409 = vshrl.u32 %v408, 7
    %v410 = vsub.s32 %v399, %v409
    %v411 = vrot.slane %v394, %v410
    %vm412 = vcmask 1041409
    %v413 = vsel %vm412, %v407, %v403
    %vm414 = vcmask 1042434
    %v415 = vsel %vm414, %v411, %v413
    %v417 = vsel %vm391, %v415, 1.0
    %v421 = vlaneseq
    %v422 = vshrl.u32 %v421, 7
    %v423 = vsub.s32 %v399, %v422
    %v424 = vrot.slane %v383, %v423
    %v425 = vlaneseq
    %v426 = vshrl.u32 %v425, 7
    %v427 = vsub.s32 %v399, %v426
    %v428 = vrot.slane %v385, %v427
    %v429 = vlaneseq
    %v430 = vshrl.u32 %v429, 7
    %v431 = vsub.s32 %v399, %v430
    %v432 = vrot.slane %v387, %v431
    %v433 = vsel %vm412, %v428, %v424
    %v434 = vsel %vm414, %v432, %v433
    %v436 = vsub.f32 %v417, %v434
    %v437 = vsub.f32 1.0, %v389
    %v439 = vlaneseq
    %v440 = vshrl.u32 %v439, 7
    %v441 = vsub.s32 0, %v440
    %v442 = vrot.slane %v436, %v441
    %444 = vbcast.lane.b32.xlu0 %v442, 256
    %v445 = vpop.permute.xlu0 %444
    %v447 = vmul.f32 %v437, %v445
    %v448 = vlaneseq
    %v449 = vshrl.u32 %v448, 7
    %v450 = vsub.s32 1, %v449
    %v451 = vrot.slane %v436, %v450
    %453 = vbcast.lane.b32.xlu0 %v451, 256
    %v454 = vpop.permute.xlu0 %453
    %v456 = vmul.f32 %v447, %v454
    %v457 = vlaneseq
    %v458 = vshrl.u32 %v457, 7
    %v459 = vsub.s32 2, %v458
    %v460 = vrot.slane %v436, %v459
    %462 = vbcast.lane.b32.xlu0 %v460, 256
    %v463 = vpop.permute.xlu0 %462
    %v465 = vmul.f32 %v456, %v463
    %v466 = vld [vmem:[%s5] sm:$0x1]
    %v468 = vlaneseq
    %v469 = vshrl.u32 %v468, 7
    %v470 = vsub.s32 0, %v469
    %v471 = vrot.slane %v466, %v470
    %473 = vbcast.lane.b32.xlu0 %v471, 256
    %v474 = vpop.permute.xlu0 %473
    %v476 = vmul.f32 %v465, %v474
    %478 = vset.pattern.permute.xlu0 0
    %479 = vperm.xlu0 %478, %v476
    %v480 = vpop.permute.xlu0 %479
    %v481 = vlaneseq
    %v482 = vshrl.u32 %v481, 7
    %v483 = vsub.s32 %v399, %v482
    %v484 = vrot.slane %v480, %v483
    %vm486 = vcmask 57344
    %v487 = vsel %vm486, %v484, 0.0
    %488 = vadd.xlane.f32.xlu0 %v487
    %v489 = vpop.xlane.xlu0 %488
    %v490 = vrot.slane %v489, 4
    %v491 = vadd.f32 %v489, %v490
    %v492 = vrot.slane %v491, 2
    %v493 = vadd.f32 %v491, %v492
    %v494 = vrot.slane %v493, 1
    %v495 = vadd.f32 %v493, %v494
    %s496 = vtos %v495
    %v497 = vstv %s496
    %v498 = vsub.f32 0.0, %v497
    %v499 = vrcp.pop 2.0
    %v500 = vmul.f32 %v498, %v499
    %vm501 = vcmask 0
    %502 = vst.msk [vmem:[#allocation7] sm:$0x1] %vm501, %v500
    // Predicated region
    $region34: #{poi2vec_loss.1} parent=1 // pred_check
      _
    $region35: #{poi2vec_loss.1} parent=1 // pred_check_branch
      %504 = sbr.rel (0) target = $region37
    $region36: #{poi2vec_loss.1} parent=1 // pred_region
      %s506 = ssub.s32 16, 16
      %507 = vsyncadd [#allocation3], %s506
      %s509 = sshll.u32 [#allocation7], 4
      %s510 = int_to_ptr.vmem [resolvable:$true] %s509
      %512 = dma.vmem_to_hbm [thread:$0]  %s510, 16, %s6, [#allocation3]
    $region37: #{poi2vec_loss.1} parent=1 // pred_fallthru
      _
    // Predicated region
    $region38: #{poi2vec_loss.1} parent=1 // pred_check
      _
    $region39: #{poi2vec_loss.1} parent=1 // pred_check_branch
      %514 = sbr.rel (0) target = $region41
    $region40: #{poi2vec_loss.1} parent=1 // pred_region
      %515 = dma.done [#allocation3], 16
    $region41: #{poi2vec_loss.1} parent=1 // pred_fallthru
      _
    %516 = vsyncpa [#allocation3], 1
    %517 = vsyncpa [#allocation4], 1
    %518 = vsyncpa [#allocation6], 1

</llo_original>
